<compile_context>
chip_gen: v7x
topology: tpu7x:2x2x1
jax: 0.10.0
libtpu: 0.0.40
codegen_flags: <defaults>
</compile_context>

<pallas_src>
import numpy as np
import jax
import jax.numpy as jnp
from jax import lax
from jax.experimental import pallas as pl
from jax.experimental.pallas import tpu as pltpu


# MXU operand dtype for the big im2col dot (accumulation stays f32).
# jnp.float32 gives ~1e-5 agreement with the reference; bf16 ~1e-2.
_DOT_DTYPE = jnp.bfloat16


# ----------------------------------------------------------------------------
# Fused kernel: 2x non-local TA  +  channel concat  +  3x3 conv (pad=1)
# ----------------------------------------------------------------------------
def _make_fused_kernel(T, C1, H, W, has_x3):
    HW = H * W

    def kernel(*refs):
        if has_x3:
            xs_ref, w_ref, wconv_ref, masks_ref, x3u_ref, out_ref = refs
        else:
            xs_ref, w_ref, wconv_ref, masks_ref, out_ref = refs
            x3u_ref = None

        # xs: [T, C1, 2*HW] f32, the two streams packed side-by-side on lanes.
        x_all = xs_ref[...]

        # ---- pooled q/k for BOTH streams, one qk dot, one score dot ---------
        pooled_a = jnp.mean(x_all[:, :, :HW], axis=-1)            # [T, C1]
        pooled_b = jnp.mean(x_all[:, :, HW:], axis=-1)            # [T, C1]
        pooled2 = jnp.concatenate([pooled_a, pooled_b], axis=0)   # [2T, C1]

        wqk = w_ref[:, :2 * C1]                                   # [Wq^T | Wk^T]
        wv = w_ref[:, 2 * C1:]                                    # [C1, C1]
        qk = jnp.dot(pooled2, wqk, preferred_element_type=jnp.float32)  # [2T, 2C1]
        q_all = qk[:, :C1]
        k_all = qk[:, C1:]
        # score[i, j] = q_i . k_j  (contract last dims; no in-kernel transpose)
        score = lax.dot_general(q_all, k_all, (((1,), (1,)), ((), ())),
                                preferred_element_type=jnp.float32)     # [2T, 2T]

        # per-stream softmax(dim=1 over keys) then mean over queries -> key wgt
        def key_weights(s):                                        # s: [T, T]
            s = s - jnp.max(s, axis=1, keepdims=True)
            e = jnp.exp(s)
            p = e / jnp.sum(e, axis=1, keepdims=True)
            return jnp.mean(p, axis=0, keepdims=True)              # [1, T]

        wgt_a = key_weights(score[:T, :T])                         # stream 0 (x1)
        wgt_b = key_weights(score[T:, T:])                         # stream 1 (x2)

        # ---- mean_t(score@val + x) == Wv @ (sum_t wgt_t x_t) + mean_t x -----
        # streams share lanes, so build a per-lane weight from the two scalars.
        half = lax.broadcasted_iota(jnp.int32, (1, 2 * HW), 1) < HW
        xw = x_all[0] * jnp.where(half, wgt_a[0, 0], wgt_b[0, 0])  # [C1, 2*HW]
        for t in range(1, T):                                      # T small, unrolled
            xw = xw + x_all[t] * jnp.where(half, wgt_a[0, t], wgt_b[0, t])
        xm = jnp.mean(x_all, axis=0)                               # [C1, 2*HW]
        feat2 = jnp.dot(wv, xw, preferred_element_type=jnp.float32) + xm

        # ---- channel concat: [stream0 | stream1 | upsampled x3] -------------
        parts = [feat2[:, :HW], feat2[:, HW:]]                     # aligned lane slices
        if has_x3:
            parts.append(x3u_ref[...])
        feat = jnp.concatenate(parts, axis=0)                      # [Cin, HW]

        # ---- 3x3 conv (pad=1) as ONE im2col dot:  K = 9*Cin + 1 -------------
        # tap shift = lane rotation (XLU); zero padding = precomputed mask.
        m_all = masks_ref[...]                                     # [9, HW] f32
        pieces = []
        for k in range(9):
            off = (k // 3 - 1) * W + (k % 3 - 1)
            if off == 0:
                pieces.append(feat)                                # centre tap: no mask
            else:
                rolled = pltpu.roll(feat, (-off) % HW, axis=1)
                pieces.append(rolled * m_all[k:k + 1, :])
        pieces.append(jnp.ones((1, HW), jnp.float32))              # bias row
        stack = jnp.concatenate(pieces, axis=0)                    # [9*Cin+1, HW]

        out_ref[...] = jnp.dot(wconv_ref[...], stack.astype(_DOT_DTYPE),
                               preferred_element_type=jnp.float32)

    return kernel


# ----------------------------------------------------------------------------
# Wrapper (layout plumbing only)
# ----------------------------------------------------------------------------
def non_local_late_forward(params, x1, x2, x3):
    """Pallas forward of Non_Local_Late.  x1, x2: [T, C1, H, W]; x3: [1, C2, h, w] or None."""
    T, C1, H, W = x1.shape
    HW = H * W
    Cout, cin_tot = params["conv_w"].shape[:2]

    # Streams packed side-by-side on the lane axis (NCHW already has HW on lane).
    xs = jnp.concatenate([x1.reshape(T, C1, HW), x2.reshape(T, C1, HW)],
                         axis=-1).astype(jnp.float32)              # [T, C1, 2*HW]

    # Small weights packed into one tile: [Wq^T | Wk^T | Wv]  -> [C1, 3*C1]
    w_small = jnp.concatenate([params["wq"].T, params["wk"].T, params["wv"]],
                              axis=1).astype(jnp.float32)

    # 3x3 conv weight flattened for im2col (tap-major, channel-minor), bias folded.
    wflat = jnp.transpose(params["conv_w"], (0, 2, 3, 1)).reshape(Cout, 9 * cin_tot)
    wflat = jnp.concatenate([wflat, params["conv_b"][:, None]],
                            axis=1).astype(_DOT_DTYPE)             # [Cout, 9*Cin+1]

    # Per-tap zero-padding masks (static -> constant-folded under jit).
    row = np.arange(HW) // W
    col = np.arange(HW) % W
    masks = np.stack(
        [((row + ky - 1 >= 0) & (row + ky - 1 < H) &
          (col + kx - 1 >= 0) & (col + kx - 1 < W)).astype(np.float32)
         for ky in range(3) for kx in range(3)], axis=0)
    masks = jnp.asarray(masks)                                     # [9, HW]

    inputs = [xs, w_small, wflat, masks]

    has_x3 = x3 is not None
    if has_x3:
        # ConvTranspose2d(k=2, s=2) + centre pad: ~4 KiB of data, kept as XLA glue.
        # TODO(synk): fold this deconv (4 per-parity 1x1 convs + lane interleave)
        # into the fused kernel as well.
        y = jnp.einsum("ncij,codk->noidjk", x3, params["up_w"])
        n, co, h, _, w, _ = y.shape
        y = y.reshape(n, co, 2 * h, 2 * w) + params["up_b"][None, :, None, None]
        diffY = H - y.shape[2]
        diffX = W - y.shape[3]
        y = jnp.pad(y, ((0, 0), (0, 0),
                        (diffY // 2, diffY - diffY // 2),
                        (diffX // 2, diffX - diffX // 2)))
        inputs.append(y[0].reshape(-1, HW).astype(jnp.float32))    # [C2, HW]

    # TODO(synk): for large H*W, tile the lane axis with a 1-row halo grid
    # (mandatory on v7x's 64 MiB VMEM; also enables megacore + pipelining).
    vmem = pl.BlockSpec(memory_space=pltpu.MemorySpace.VMEM)
    out = pl.pallas_call(
        _make_fused_kernel(T, C1, H, W, has_x3),
        out_shape=jax.ShapeDtypeStruct((Cout, HW), jnp.float32),
        in_specs=[vmem] * len(inputs),
        out_specs=vmem,
    )(*inputs)
    return out.reshape(1, Cout, H, W)


# ----------------------------------------------------------------------------
# Pure-JAX reference (mirrors the torch module) for a correctness cross-check
# ----------------------------------------------------------------------------
def _non_local_ref(x, wq, wk, wv):
    pooled = jnp.mean(x, axis=(2, 3))
    q = pooled @ wq.T
    k = pooled @ wk.T
    s = jax.nn.softmax(q @ k.T, axis=1)
    val = jnp.einsum("oc,tchw->tohw", wv, x)
    fused = jnp.einsum("ts,schw->tchw", s, val) + x
    return jnp.mean(fused, axis=0)[None]


def _forward_ref(params, x1, x2, x3):
    a = _non_local_ref(x1, params["wq"], params["wk"], params["wv"])
    b = _non_local_ref(x2, params["wq"], params["wk"], params["wv"])
    out = jnp.concatenate([a, b], axis=1)
    if x3 is not None:
        y = jnp.einsum("ncij,codk->noidjk", x3, params["up_w"])
        n, co, h, _, w, _ = y.shape
        y = y.reshape(n, co, 2 * h, 2 * w) + params["up_b"][None, :, None, None]
        diffY = out.shape[2] - y.shape[2]
        diffX = out.shape[3] - y.shape[3]
        y = jnp.pad(y, ((0, 0), (0, 0),
                        (diffY // 2, diffY - diffY // 2),
                        (diffX // 2, diffX - diffX // 2)))
        out = jnp.concatenate([out, y], axis=1)
    c = lax.conv_general_dilated(out, params["conv_w"], (1, 1),
                                 padding=[(1, 1), (1, 1)],
                                 dimension_numbers=("NCHW", "OIHW", "NCHW"))
    return c + params["conv_b"][None, :, None, None]


# ----------------------------------------------------------------------------
if __name__ == "__main__":
    T, C1, C2, COUT, H, W = 4, 8, 4, 8, 16, 16

    key = jax.random.PRNGKey(0)
    ks = jax.random.split(key, 10)
    params = {
        "wq":     0.2 * jax.random.normal(ks[0], (C1, C1), jnp.float32),
        "wk":     0.2 * jax.random.normal(ks[1], (C1, C1), jnp.float32),
        "wv":     0.2 * jax.random.normal(ks[2], (C1, C1), jnp.float32),   # 1x1 conv wt squeezed
        "up_w":   0.2 * jax.random.normal(ks[3], (C2, C2, 2, 2), jnp.float32),
        "up_b":   0.1 * jax.random.normal(ks[4], (C2,), jnp.float32),
        "conv_w": 0.1 * jax.random.normal(ks[5], (COUT, 2 * C1 + C2, 3, 3), jnp.float32),
        "conv_b": 0.1 * jax.random.normal(ks[6], (COUT,), jnp.float32),
    }

    x1 = jax.random.normal(ks[7], (T, C1, H, W), jnp.float32)
    x2 = jax.random.normal(ks[8], (T, C1, H, W), jnp.float32)
    x3 = jax.random.normal(ks[9], (1, C2, H // 2, W // 2), jnp.float32)

    out = jax.jit(non_local_late_forward)(params, x1, x2, x3)
    out = jax.block_until_ready(out)

    assert out.shape == (1, COUT, H, W), out.shape
    ref = jax.block_until_ready(_forward_ref(params, x1, x2, x3))
    assert jnp.all(jnp.isfinite(out))
    # bf16 MXU operands on the big conv dot -> ~1e-2 tolerance; f32 -> 1e-3.
    tol = 2e-2 if _DOT_DTYPE == jnp.bfloat16 else 1e-3
    max_err = float(jnp.max(jnp.abs(out - ref)))
    assert jnp.allclose(out, ref, rtol=tol, atol=tol), max_err

    print("KERNEL_OK")
</pallas_src>

<mosaic_0001>
module attributes {stable_mosaic.version = 11 : i64} {
  func.func @kernel(%arg0: memref<4x8x512xf32, #tpu.memory_space<vmem>>, %arg1: memref<8x24xf32, #tpu.memory_space<vmem>>, %arg2: memref<8x181xbf16, #tpu.memory_space<vmem>>, %arg3: memref<9x256xf32, #tpu.memory_space<vmem>>, %arg4: memref<4x256xf32, #tpu.memory_space<vmem>>, %arg5: memref<8x256xf32, #tpu.memory_space<vmem>>) attributes {dimension_semantics = [], scalar_prefetch = 0 : i64, scratch_operands = 0 : i64, tpu.core_type = #tpu.core_type<tc>} {
    %c0 = arith.constant 0 : index
    %c0_0 = arith.constant 0 : index
    %c0_1 = arith.constant 0 : index
    %0 = vector.load %arg0[%c0, %c0_0, %c0_1] : memref<4x8x512xf32, #tpu.memory_space<vmem>>, vector<4x8x512xf32>
    %1 = vector.extract_strided_slice %0 {offsets = [0, 0, 0], sizes = [4, 8, 256], strides = [1, 1, 1]} : vector<4x8x512xf32> to vector<4x8x256xf32>
    %cst = arith.constant dense<0.000000e+00> : vector<4x8xf32>
    %2 = vector.multi_reduction <add>, %1, %cst [2] : vector<4x8x256xf32> to vector<4x8xf32>
    %cst_2 = arith.constant 2.560000e+02 : f32
    %3 = vector.broadcast %cst_2 : f32 to vector<4x8xf32>
    %4 = arith.divf %2, %3 : vector<4x8xf32>
    %5 = vector.extract_strided_slice %0 {offsets = [0, 0, 256], sizes = [4, 8, 256], strides = [1, 1, 1]} : vector<4x8x512xf32> to vector<4x8x256xf32>
    %cst_3 = arith.constant dense<0.000000e+00> : vector<4x8xf32>
    %6 = vector.multi_reduction <add>, %5, %cst_3 [2] : vector<4x8x256xf32> to vector<4x8xf32>
    %cst_4 = arith.constant 2.560000e+02 : f32
    %7 = vector.broadcast %cst_4 : f32 to vector<4x8xf32>
    %8 = arith.divf %6, %7 : vector<4x8xf32>
    %9 = tpu.concatenate %4, %8 in 0 : vector<4x8xf32>, vector<4x8xf32> -> vector<8x8xf32>
    %c0_5 = arith.constant 0 : index
    %c0_6 = arith.constant 0 : index
    %10 = vector.load %arg1[%c0_5, %c0_6] : memref<8x24xf32, #tpu.memory_space<vmem>>, vector<8x16xf32>
    %c0_7 = arith.constant 0 : index
    %c16 = arith.constant 16 : index
    %11 = vector.load %arg1[%c0_7, %c16] : memref<8x24xf32, #tpu.memory_space<vmem>>, vector<8x8xf32>
    %cst_8 = arith.constant dense<0.000000e+00> : vector<8x16xf32>
    %12 = tpu.matmul %9, %10, %cst_8 {dimension_numbers = #tpu.dot_dimension_numbers<[1], [0], [0], [1], [0, 0, 1, 1], [], []>} : vector<8x8xf32>, vector<8x16xf32>, vector<8x16xf32> -> vector<8x16xf32>
    %13 = vector.extract_strided_slice %12 {offsets = [0, 0], sizes = [8, 8], strides = [1, 1]} : vector<8x16xf32> to vector<8x8xf32>
    %14 = vector.extract_strided_slice %12 {offsets = [0, 8], sizes = [8, 8], strides = [1, 1]} : vector<8x16xf32> to vector<8x8xf32>
    %cst_9 = arith.constant dense<0.000000e+00> : vector<8x8xf32>
    %15 = tpu.matmul %13, %14, %cst_9 {dimension_numbers = #tpu.dot_dimension_numbers<[1], [1], [0], [0], [0, 0, 1, 0], [], []>} : vector<8x8xf32>, vector<8x8xf32>, vector<8x8xf32> -> vector<8x8xf32>
    %16 = vector.extract_strided_slice %15 {offsets = [0, 0], sizes = [4, 4], strides = [1, 1]} : vector<8x8xf32> to vector<4x4xf32>
    %cst_10 = arith.constant dense<0xFF800000> : vector<4xf32>
    %17 = vector.multi_reduction <maximumf>, %16, %cst_10 [1] : vector<4x4xf32> to vector<4xf32>
    %18 = vector.shape_cast %17 : vector<4xf32> to vector<4x1xf32>
    %19 = vector.broadcast %18 : vector<4x1xf32> to vector<4x4xf32>
    %20 = arith.subf %16, %19 : vector<4x4xf32>
    %21 = math.exp %20 : vector<4x4xf32>
    %cst_11 = arith.constant dense<0.000000e+00> : vector<4xf32>
    %22 = vector.multi_reduction <add>, %21, %cst_11 [1] : vector<4x4xf32> to vector<4xf32>
    %23 = vector.shape_cast %22 : vector<4xf32> to vector<4x1xf32>
    %24 = vector.broadcast %23 : vector<4x1xf32> to vector<4x4xf32>
    %25 = arith.divf %21, %24 : vector<4x4xf32>
    %cst_12 = arith.constant dense<0.000000e+00> : vector<4xf32>
    %26 = vector.multi_reduction <add>, %25, %cst_12 [0] : vector<4x4xf32> to vector<4xf32>
    %27 = vector.shape_cast %26 : vector<4xf32> to vector<1x4xf32>
    %cst_13 = arith.constant 4.000000e+00 : f32
    %28 = vector.broadcast %cst_13 : f32 to vector<1x4xf32>
    %29 = arith.divf %27, %28 : vector<1x4xf32>
    %30 = vector.extract_strided_slice %15 {offsets = [4, 4], sizes = [4, 4], strides = [1, 1]} : vector<8x8xf32> to vector<4x4xf32>
    %cst_14 = arith.constant dense<0xFF800000> : vector<4xf32>
    %31 = vector.multi_reduction <maximumf>, %30, %cst_14 [1] : vector<4x4xf32> to vector<4xf32>
    %32 = vector.shape_cast %31 : vector<4xf32> to vector<4x1xf32>
    %33 = vector.broadcast %32 : vector<4x1xf32> to vector<4x4xf32>
    %34 = arith.subf %30, %33 : vector<4x4xf32>
    %35 = math.exp %34 : vector<4x4xf32>
    %cst_15 = arith.constant dense<0.000000e+00> : vector<4xf32>
    %36 = vector.multi_reduction <add>, %35, %cst_15 [1] : vector<4x4xf32> to vector<4xf32>
    %37 = vector.shape_cast %36 : vector<4xf32> to vector<4x1xf32>
    %38 = vector.broadcast %37 : vector<4x1xf32> to vector<4x4xf32>
    %39 = arith.divf %35, %38 : vector<4x4xf32>
    %cst_16 = arith.constant dense<0.000000e+00> : vector<4xf32>
    %40 = vector.multi_reduction <add>, %39, %cst_16 [0] : vector<4x4xf32> to vector<4xf32>
    %41 = vector.shape_cast %40 : vector<4xf32> to vector<1x4xf32>
    %cst_17 = arith.constant 4.000000e+00 : f32
    %42 = vector.broadcast %cst_17 : f32 to vector<1x4xf32>
    %43 = arith.divf %41, %42 : vector<1x4xf32>
    %44 = tpu.iota {dimensions = array<i32: 1>} : vector<1x512xi32>
    %c256_i32 = arith.constant 256 : i32
    %45 = vector.broadcast %c256_i32 : i32 to vector<1x512xi32>
    %46 = arith.cmpi slt, %44, %45 : vector<1x512xi32>
    %47 = vector.extract_strided_slice %0 {offsets = [0, 0, 0], sizes = [1, 8, 512], strides = [1, 1, 1]} : vector<4x8x512xf32> to vector<1x8x512xf32>
    %48 = vector.shape_cast %47 : vector<1x8x512xf32> to vector<8x512xf32>
    %49 = vector.extract_strided_slice %29 {offsets = [0, 0], sizes = [1, 1], strides = [1, 1]} : vector<1x4xf32> to vector<1x1xf32>
    %50 = vector.extract %49[0, 0] : f32 from vector<1x1xf32>
    %51 = vector.extract_strided_slice %43 {offsets = [0, 0], sizes = [1, 1], strides = [1, 1]} : vector<1x4xf32> to vector<1x1xf32>
    %52 = vector.extract %51[0, 0] : f32 from vector<1x1xf32>
    %53 = vector.broadcast %50 : f32 to vector<1x512xf32>
    %54 = vector.broadcast %52 : f32 to vector<1x512xf32>
    %55 = arith.select %46, %53, %54 : vector<1x512xi1>, vector<1x512xf32>
    %56 = vector.broadcast %55 : vector<1x512xf32> to vector<8x512xf32>
    %57 = arith.mulf %48, %56 : vector<8x512xf32>
    %58 = vector.extract_strided_slice %0 {offsets = [1, 0, 0], sizes = [1, 8, 512], strides = [1, 1, 1]} : vector<4x8x512xf32> to vector<1x8x512xf32>
    %59 = vector.shape_cast %58 : vector<1x8x512xf32> to vector<8x512xf32>
    %60 = vector.extract_strided_slice %29 {offsets = [0, 1], sizes = [1, 1], strides = [1, 1]} : vector<1x4xf32> to vector<1x1xf32>
    %61 = vector.extract %60[0, 0] : f32 from vector<1x1xf32>
    %62 = vector.extract_strided_slice %43 {offsets = [0, 1], sizes = [1, 1], strides = [1, 1]} : vector<1x4xf32> to vector<1x1xf32>
    %63 = vector.extract %62[0, 0] : f32 from vector<1x1xf32>
    %64 = vector.broadcast %61 : f32 to vector<1x512xf32>
    %65 = vector.broadcast %63 : f32 to vector<1x512xf32>
    %66 = arith.select %46, %64, %65 : vector<1x512xi1>, vector<1x512xf32>
    %67 = vector.broadcast %66 : vector<1x512xf32> to vector<8x512xf32>
    %68 = arith.mulf %59, %67 : vector<8x512xf32>
    %69 = arith.addf %57, %68 : vector<8x512xf32>
    %70 = vector.extract_strided_slice %0 {offsets = [2, 0, 0], sizes = [1, 8, 512], strides = [1, 1, 1]} : vector<4x8x512xf32> to vector<1x8x512xf32>
    %71 = vector.shape_cast %70 : vector<1x8x512xf32> to vector<8x512xf32>
    %72 = vector.extract_strided_slice %29 {offsets = [0, 2], sizes = [1, 1], strides = [1, 1]} : vector<1x4xf32> to vector<1x1xf32>
    %73 = vector.extract %72[0, 0] : f32 from vector<1x1xf32>
    %74 = vector.extract_strided_slice %43 {offsets = [0, 2], sizes = [1, 1], strides = [1, 1]} : vector<1x4xf32> to vector<1x1xf32>
    %75 = vector.extract %74[0, 0] : f32 from vector<1x1xf32>
    %76 = vector.broadcast %73 : f32 to vector<1x512xf32>
    %77 = vector.broadcast %75 : f32 to vector<1x512xf32>
    %78 = arith.select %46, %76, %77 : vector<1x512xi1>, vector<1x512xf32>
    %79 = vector.broadcast %78 : vector<1x512xf32> to vector<8x512xf32>
    %80 = arith.mulf %71, %79 : vector<8x512xf32>
    %81 = arith.addf %69, %80 : vector<8x512xf32>
    %82 = vector.extract_strided_slice %0 {offsets = [3, 0, 0], sizes = [1, 8, 512], strides = [1, 1, 1]} : vector<4x8x512xf32> to vector<1x8x512xf32>
    %83 = vector.shape_cast %82 : vector<1x8x512xf32> to vector<8x512xf32>
    %84 = vector.extract_strided_slice %29 {offsets = [0, 3], sizes = [1, 1], strides = [1, 1]} : vector<1x4xf32> to vector<1x1xf32>
    %85 = vector.extract %84[0, 0] : f32 from vector<1x1xf32>
    %86 = vector.extract_strided_slice %43 {offsets = [0, 3], sizes = [1, 1], strides = [1, 1]} : vector<1x4xf32> to vector<1x1xf32>
    %87 = vector.extract %86[0, 0] : f32 from vector<1x1xf32>
    %88 = vector.broadcast %85 : f32 to vector<1x512xf32>
    %89 = vector.broadcast %87 : f32 to vector<1x512xf32>
    %90 = arith.select %46, %88, %89 : vector<1x512xi1>, vector<1x512xf32>
    %91 = vector.broadcast %90 : vector<1x512xf32> to vector<8x512xf32>
    %92 = arith.mulf %83, %91 : vector<8x512xf32>
    %93 = arith.addf %81, %92 : vector<8x512xf32>
    %cst_18 = arith.constant dense<0.000000e+00> : vector<8x512xf32>
    %94 = vector.multi_reduction <add>, %0, %cst_18 [0] : vector<4x8x512xf32> to vector<8x512xf32>
    %cst_19 = arith.constant 4.000000e+00 : f32
    %95 = vector.broadcast %cst_19 : f32 to vector<8x512xf32>
    %96 = arith.divf %94, %95 : vector<8x512xf32>
    %cst_20 = arith.constant dense<0.000000e+00> : vector<8x512xf32>
    %97 = tpu.matmul %11, %93, %cst_20 {dimension_numbers = #tpu.dot_dimension_numbers<[1], [0], [0], [1], [0, 0, 1, 1], [], []>} : vector<8x8xf32>, vector<8x512xf32>, vector<8x512xf32> -> vector<8x512xf32>
    %98 = arith.addf %97, %96 : vector<8x512xf32>
    %99 = vector.extract_strided_slice %98 {offsets = [0, 0], sizes = [8, 256], strides = [1, 1]} : vector<8x512xf32> to vector<8x256xf32>
    %100 = vector.extract_strided_slice %98 {offsets = [0, 256], sizes = [8, 256], strides = [1, 1]} : vector<8x512xf32> to vector<8x256xf32>
    %c0_21 = arith.constant 0 : index
    %c0_22 = arith.constant 0 : index
    %101 = vector.load %arg4[%c0_21, %c0_22] : memref<4x256xf32, #tpu.memory_space<vmem>>, vector<4x256xf32>
    %102 = tpu.concatenate %99, %100, %101 in 0 : vector<8x256xf32>, vector<8x256xf32>, vector<4x256xf32> -> vector<20x256xf32>
    %c0_23 = arith.constant 0 : index
    %c0_24 = arith.constant 0 : index
    %103 = vector.load %arg3[%c0_23, %c0_24] : memref<9x256xf32, #tpu.memory_space<vmem>>, vector<9x256xf32>
    %c17_i32 = arith.constant 17 : i32
    %104 = tpu.dynamic_rotate %102 by %c17_i32 dim 1 : vector<20x256xf32>, i32 -> vector<20x256xf32>
    %105 = vector.extract_strided_slice %103 {offsets = [0, 0], sizes = [1, 256], strides = [1, 1]} : vector<9x256xf32> to vector<1x256xf32>
    %106 = vector.broadcast %105 : vector<1x256xf32> to vector<20x256xf32>
    %107 = arith.mulf %104, %106 : vector<20x256xf32>
    %c16_i32 = arith.constant 16 : i32
    %108 = tpu.dynamic_rotate %102 by %c16_i32 dim 1 : vector<20x256xf32>, i32 -> vector<20x256xf32>
    %109 = vector.extract_strided_slice %103 {offsets = [1, 0], sizes = [1, 256], strides = [1, 1]} : vector<9x256xf32> to vector<1x256xf32>
    %110 = vector.broadcast %109 : vector<1x256xf32> to vector<20x256xf32>
    %111 = arith.mulf %108, %110 : vector<20x256xf32>
    %c15_i32 = arith.constant 15 : i32
    %112 = tpu.dynamic_rotate %102 by %c15_i32 dim 1 : vector<20x256xf32>, i32 -> vector<20x256xf32>
    %113 = vector.extract_strided_slice %103 {offsets = [2, 0], sizes = [1, 256], strides = [1, 1]} : vector<9x256xf32> to vector<1x256xf32>
    %114 = vector.broadcast %113 : vector<1x256xf32> to vector<20x256xf32>
    %115 = arith.mulf %112, %114 : vector<20x256xf32>
    %c1_i32 = arith.constant 1 : i32
    %116 = tpu.dynamic_rotate %102 by %c1_i32 dim 1 : vector<20x256xf32>, i32 -> vector<20x256xf32>
    %117 = vector.extract_strided_slice %103 {offsets = [3, 0], sizes = [1, 256], strides = [1, 1]} : vector<9x256xf32> to vector<1x256xf32>
    %118 = vector.broadcast %117 : vector<1x256xf32> to vector<20x256xf32>
    %119 = arith.mulf %116, %118 : vector<20x256xf32>
    %c255_i32 = arith.constant 255 : i32
    %120 = tpu.dynamic_rotate %102 by %c255_i32 dim 1 : vector<20x256xf32>, i32 -> vector<20x256xf32>
    %121 = vector.extract_strided_slice %103 {offsets = [5, 0], sizes = [1, 256], strides = [1, 1]} : vector<9x256xf32> to vector<1x256xf32>
    %122 = vector.broadcast %121 : vector<1x256xf32> to vector<20x256xf32>
    %123 = arith.mulf %120, %122 : vector<20x256xf32>
    %c241_i32 = arith.constant 241 : i32
    %124 = tpu.dynamic_rotate %102 by %c241_i32 dim 1 : vector<20x256xf32>, i32 -> vector<20x256xf32>
    %125 = vector.extract_strided_slice %103 {offsets = [6, 0], sizes = [1, 256], strides = [1, 1]} : vector<9x256xf32> to vector<1x256xf32>
    %126 = vector.broadcast %125 : vector<1x256xf32> to vector<20x256xf32>
    %127 = arith.mulf %124, %126 : vector<20x256xf32>
    %c240_i32 = arith.constant 240 : i32
    %128 = tpu.dynamic_rotate %102 by %c240_i32 dim 1 : vector<20x256xf32>, i32 -> vector<20x256xf32>
    %129 = vector.extract_strided_slice %103 {offsets = [7, 0], sizes = [1, 256], strides = [1, 1]} : vector<9x256xf32> to vector<1x256xf32>
    %130 = vector.broadcast %129 : vector<1x256xf32> to vector<20x256xf32>
    %131 = arith.mulf %128, %130 : vector<20x256xf32>
    %c239_i32 = arith.constant 239 : i32
    %132 = tpu.dynamic_rotate %102 by %c239_i32 dim 1 : vector<20x256xf32>, i32 -> vector<20x256xf32>
    %133 = vector.extract_strided_slice %103 {offsets = [8, 0], sizes = [1, 256], strides = [1, 1]} : vector<9x256xf32> to vector<1x256xf32>
    %134 = vector.broadcast %133 : vector<1x256xf32> to vector<20x256xf32>
    %135 = arith.mulf %132, %134 : vector<20x256xf32>
    %cst_25 = arith.constant 1.000000e+00 : f32
    %136 = vector.broadcast %cst_25 : f32 to vector<1x256xf32>
    %137 = tpu.concatenate %107, %111, %115, %119, %102, %123, %127, %131, %135, %136 in 0 : vector<20x256xf32>, vector<20x256xf32>, vector<20x256xf32>, vector<20x256xf32>, vector<20x256xf32>, vector<20x256xf32>, vector<20x256xf32>, vector<20x256xf32>, vector<20x256xf32>, vector<1x256xf32> -> vector<181x256xf32>
    %c0_26 = arith.constant 0 : index
    %c0_27 = arith.constant 0 : index
    %138 = vector.load %arg2[%c0_26, %c0_27] : memref<8x181xbf16, #tpu.memory_space<vmem>>, vector<8x181xbf16>
    %139 = arith.truncf %137 : vector<181x256xf32> to vector<181x256xbf16>
    %cst_28 = arith.constant dense<0.000000e+00> : vector<8x256xf32>
    %140 = tpu.matmul %138, %139, %cst_28 {dimension_numbers = #tpu.dot_dimension_numbers<[1], [0], [0], [1], [0, 0, 1, 1], [], []>} : vector<8x181xbf16>, vector<181x256xbf16>, vector<8x256xf32> -> vector<8x256xf32>
    %c0_29 = arith.constant 0 : index
    %c0_30 = arith.constant 0 : index
    %141 = vector.load %arg5[%c0_29, %c0_30] : memref<8x256xf32, #tpu.memory_space<vmem>>, vector<8x256xf32>
    tpu.vector_store %arg5[%c0_29, %c0_30], %140 {strides = array<i32>} : memref<8x256xf32, #tpu.memory_space<vmem>>, vector<8x256xf32>,
    return
  }
}

</mosaic_0001>

<llo_original>
// kernel: non_local_late_forward.1
$region0: #{non_local_late_forward.1}
  #allocation0 [shape = 'u32[]', space=smem, size = 0x4, offset = 0x4, fixed_abs, tag = 'smem constant byte address 0x4 - core index']
  #allocation1 [shape = 'u32[144,128]{1,0:T(1,128)}', space=vmem, size = 0x12000, scoped, tag = 'internal scratch']
  %s0 = inlined_call_operand.vmem [shape: f32[4,8,512], index: 0, kind: input, shape index: {}]
  %s1 = inlined_call_operand.vmem [shape: f32[8,24], index: 1, kind: input, shape index: {}]
  %s2 = inlined_call_operand.vmem [shape: bf16[8,181], index: 2, kind: input, shape index: {}]
  %s3 = inlined_call_operand.vmem [shape: f32[9,256], index: 3, kind: input, shape index: {}]
  %s4 = inlined_call_operand.vmem [shape: f32[4,256], index: 4, kind: input, shape index: {}]
  %s5 = inlined_call_operand.vmem [shape: f32[8,256], index: 5, kind: output, shape index: {}]
  %s6 = sld [smem:[#allocation0]]
  $region30: #{non_local_late_forward.1} parent=0
    _
  %s8 = ssub.s32 1, %s6
  %s9 = scalar_select 0, %s8, %s6
  // Predicated region
  $region2: #{non_local_late_forward.1} parent=0 // pred_check
    _
  $region3: #{non_local_late_forward.1} parent=0 // pred_check_branch
    %11 = sbr.rel (0) target = $region5
  $region4: #{non_local_late_forward.1} parent=0 // pred_region
    _
  $region5: #{non_local_late_forward.1} parent=0 // pred_fallthru
    _
  // Predicated region
  $region6: #{non_local_late_forward.1} parent=0 // pred_check
    _
  $region7: #{non_local_late_forward.1} parent=0 // pred_check_branch
    %13 = sbr.rel (0) target = $region9
  $region8: #{non_local_late_forward.1} parent=0 // pred_region
    _
  $region9: #{non_local_late_forward.1} parent=0 // pred_fallthru
    _
  // Predicated region
  $region10: #{non_local_late_forward.1} parent=0 // pred_check
    _
  $region11: #{non_local_late_forward.1} parent=0 // pred_check_branch
    %15 = sbr.rel (0) target = $region13
  $region12: #{non_local_late_forward.1} parent=0 // pred_region
    _
  $region13: #{non_local_late_forward.1} parent=0 // pred_fallthru
    _
  // Predicated region
  $region14: #{non_local_late_forward.1} parent=0 // pred_check
    _
  $region15: #{non_local_late_forward.1} parent=0 // pred_check_branch
    %17 = sbr.rel (0) target = $region17
  $region16: #{non_local_late_forward.1} parent=0 // pred_region
    _
  $region17: #{non_local_late_forward.1} parent=0 // pred_fallthru
    _
  // Predicated region
  $region18: #{non_local_late_forward.1} parent=0 // pred_check
    _
  $region19: #{non_local_late_forward.1} parent=0 // pred_check_branch
    %19 = sbr.rel (0) target = $region21
  $region20: #{non_local_late_forward.1} parent=0 // pred_region
    _
  $region21: #{non_local_late_forward.1} parent=0 // pred_fallthru
    _
  %v21 = vld [vmem:[%s0] sm:$0xff]
  %v22 = vld [vmem:[%s0 + $0x8] sm:$0xff]
  %v23 = vld [vmem:[%s0 + $0x10] sm:$0xff]
  %v24 = vld [vmem:[%s0 + $0x18] sm:$0xff]
  %v25 = vld [vmem:[%s0 + $0x20] sm:$0xff]
  %v26 = vld [vmem:[%s0 + $0x28] sm:$0xff]
  %v27 = vld [vmem:[%s0 + $0x30] sm:$0xff]
  %v28 = vld [vmem:[%s0 + $0x38] sm:$0xff]
  %v29 = vld [vmem:[%s0 + $0x40] sm:$0xff]
  %v30 = vld [vmem:[%s0 + $0x48] sm:$0xff]
  %v31 = vld [vmem:[%s0 + $0x50] sm:$0xff]
  %v32 = vld [vmem:[%s0 + $0x58] sm:$0xff]
  %v33 = vld [vmem:[%s0 + $0x60] sm:$0xff]
  %v34 = vld [vmem:[%s0 + $0x68] sm:$0xff]
  %v35 = vld [vmem:[%s0 + $0x70] sm:$0xff]
  %v36 = vld [vmem:[%s0 + $0x78] sm:$0xff]
  %v37 = vadd.f32 %v21, %v22
  %38 = vadd.xlane.f32.xlu0 %v37
  %v39 = vpop.xlane.xlu0 %38
  %v40 = vadd.f32 %v25, %v26
  %41 = vadd.xlane.f32.xlu0 %v40
  %v42 = vpop.xlane.xlu0 %41
  %v43 = vadd.f32 %v29, %v30
  %44 = vadd.xlane.f32.xlu0 %v43
  %v45 = vpop.xlane.xlu0 %44
  %v46 = vadd.f32 %v33, %v34
  %47 = vadd.xlane.f32.xlu0 %v46
  %v48 = vpop.xlane.xlu0 %47
  %v49 = vrcp.pop 256.0
  %v50 = vmul.f32 %v39, %v49
  %v51 = vmul.f32 %v42, %v49
  %v52 = vmul.f32 %v45, %v49
  %v53 = vmul.f32 %v48, %v49
  %v54 = vadd.f32 %v23, %v24
  %55 = vadd.xlane.f32.xlu0 %v54
  %v56 = vpop.xlane.xlu0 %55
  %v57 = vadd.f32 %v27, %v28
  %58 = vadd.xlane.f32.xlu0 %v57
  %v59 = vpop.xlane.xlu0 %58
  %v60 = vadd.f32 %v31, %v32
  %61 = vadd.xlane.f32.xlu0 %v60
  %v62 = vpop.xlane.xlu0 %61
  %v63 = vadd.f32 %v35, %v36
  %64 = vadd.xlane.f32.xlu0 %v63
  %v65 = vpop.xlane.xlu0 %64
  %v66 = vmul.f32 %v56, %v49
  %v67 = vmul.f32 %v59, %v49
  %v68 = vmul.f32 %v62, %v49
  %v69 = vmul.f32 %v65, %v49
  %v74 = vlaneseq
  %v75 = vand.u32 %v74, 127
  %v76 = vlaneseq
  %v77 = vshrl.u32 %v76, 7
  %v78 = vsub.s32 %v75, %v77
  %v79 = vrot.slane %v50, %v78
  %v80 = vlaneseq
  %v81 = vshrl.u32 %v80, 7
  %v82 = vsub.s32 %v75, %v81
  %v83 = vrot.slane %v51, %v82
  %v84 = vlaneseq
  %v85 = vshrl.u32 %v84, 7
  %v86 = vsub.s32 %v75, %v85
  %v87 = vrot.slane %v52, %v86
  %v88 = vlaneseq
  %v89 = vshrl.u32 %v88, 7
  %v90 = vsub.s32 %v75, %v89
  %v91 = vrot.slane %v53, %v90
  %vm92 = vcmask 1041409
  %v93 = vsel %vm92, %v83, %v79
  %vm94 = vcmask 1042434
  %v95 = vsel %vm94, %v87, %v93
  %vm96 = vcmask 1043459
  %v97 = vsel %vm96, %v91, %v95
  %v103 = vlaneseq
  %v104 = vshrl.u32 %v103, 7
  %v105 = vsub.s32 %v75, %v104
  %v106 = vrot.slane %v66, %v105
  %v107 = vlaneseq
  %v108 = vshrl.u32 %v107, 7
  %v109 = vsub.s32 %v75, %v108
  %v110 = vrot.slane %v67, %v109
  %v111 = vlaneseq
  %v112 = vshrl.u32 %v111, 7
  %v113 = vsub.s32 %v75, %v112
  %v114 = vrot.slane %v68, %v113
  %v115 = vlaneseq
  %v116 = vshrl.u32 %v115, 7
  %v117 = vsub.s32 %v75, %v116
  %v118 = vrot.slane %v69, %v117
  %vm119 = vcmask 1045509
  %v120 = vsel %vm119, %v110, %v106
  %vm121 = vcmask 1046534
  %v122 = vsel %vm121, %v114, %v120
  %vm123 = vcmask 1047559
  %v124 = vsel %vm123, %v118, %v122
  %vm126 = vcmask 1043456
  %v127 = vsel %vm126, %v97, %v124
  %v128 = vld [vmem:[%s1] sm:$0xff]
  %vm129 = vcmask 64512
  %v131 = vsel %vm129, %v127, 0
  %133 = vmatprep.subr.mxu0 0.0
  %134 = vmatpush1.msra.mxu0 %v128
  %135 = vmatprep.subr.mxu0 0.0
  %136 = vmatpush1.msra.mxu0 0.0
  %137 = vmatprep.subr.mxu0 0.0
  %138 = vmatpush1.msra.mxu0 0.0
  %139 = vmatprep.subr.mxu0 0.0
  %140 = vmatpush1.msra.mxu0 0.0
  %141 = vmatprep.subr.mxu0 0.0
  %142 = vmatpush1.msra.mxu0 0.0
  %143 = vmatprep.subr.mxu0 0.0
  %144 = vmatpush1.msra.mxu0 0.0
  %145 = vmatprep.subr.mxu0 0.0
  %146 = vmatpush1.msra.mxu0 0.0
  %147 = vmatprep.subr.mxu0 0.0
  %148 = vmatpush1.msra.mxu0 0.0
  %149 = vmatprep.subr.mxu0 0.0
  %150 = vmatpush1.msra.mxu0 0.0
  %151 = vmatprep.subr.mxu0 0.0
  %152 = vmatpush1.msra.mxu0 0.0
  %153 = vmatprep.subr.mxu0 0.0
  %154 = vmatpush1.msra.mxu0 0.0
  %155 = vmatprep.subr.mxu0 0.0
  %156 = vmatpush1.msra.mxu0 0.0
  %157 = vmatprep.subr.mxu0 0.0
  %158 = vmatpush1.msra.mxu0 0.0
  %159 = vmatprep.subr.mxu0 0.0
  %160 = vmatpush1.msra.mxu0 0.0
  %161 = vmatprep.subr.mxu0 0.0
  %162 = vmatpush1.msra.mxu0 0.0
  %163 = vmatprep.subr.mxu0 0.0
  %164 = vmatpush1.msra.mxu0 0.0
  %165 = vmatprep.subr.mxu0 0.0
  %166 = vmatpush1.msra.mxu0 0.0
  %167 = vmatprep.subr.mxu0 0.0
  %168 = vmatpush1.msra.mxu0 0.0
  %169 = vmatprep.subr.mxu0 0.0
  %170 = vmatpush1.msra.mxu0 0.0
  %171 = vmatprep.subr.mxu0 0.0
  %172 = vmatpush1.msra.mxu0 0.0
  %173 = vmatprep.subr.mxu0 0.0
  %174 = vmatpush1.msra.mxu0 0.0
  %175 = vmatprep.subr.mxu0 0.0
  %176 = vmatpush1.msra.mxu0 0.0
  %177 = vmatprep.subr.mxu0 0.0
  %178 = vmatpush1.msra.mxu0 0.0
  %179 = vmatprep.subr.mxu0 0.0
  %180 = vmatpush1.msra.mxu0 0.0
  %181 = vmatprep.subr.mxu0 0.0
  %182 = vmatpush1.msra.mxu0 0.0
  %183 = vmatprep.subr.mxu0 0.0
  %184 = vmatpush1.msra.mxu0 0.0
  %185 = vmatprep.subr.mxu0 0.0
  %186 = vmatpush1.msra.mxu0 0.0
  %187 = vmatprep.subr.mxu0 0.0
  %188 = vmatpush1.msra.mxu0 0.0
  %189 = vmatprep.subr.mxu0 0.0
  %190 = vmatpush1.msra.mxu0 0.0
  %191 = vmatprep.subr.mxu0 0.0
  %192 = vmatpush1.msra.mxu0 0.0
  %193 = vmatprep.subr.mxu0 0.0
  %194 = vmatpush1.msra.mxu0 0.0
  %195 = vmatprep.subr.mxu0 0.0
  %196 = vmatpush1.msra.mxu0 0.0
  %197 = vmatprep.mubr.f32.mxu0 0.0
  %198 = vmatmul.mubr.f32.gmra.mrb[0].mxu0 %v131
  %v199 = vpop.f32.mrb[0].mxu0
  %v200 = vadd.f32 0.0, %v199
  %v201 = vpop.f32.mrb[0].mxu0
  %202 = vdwg.mxu0
  %204 = vrot.lane.b32.xlu0 %v200, 120
  %v205 = vpop.permute.xlu0 %204
  %v206 = vsel %vm129, %v200, 0
  %v208 = vsel %vm129, %v205, 0
  %210 = vmatprep.subr.mxu0 0.0
  %211 = vmatpush1.xpose.msra.mxu0 %v208
  %212 = vmatprep.subr.mxu0 0.0
  %213 = vmatpush1.xpose.msra.mxu0 0.0
  %214 = vmatprep.subr.mxu0 0.0
  %215 = vmatpush1.xpose.msra.mxu0 0.0
  %216 = vmatprep.subr.mxu0 0.0
  %217 = vmatpush1.xpose.msra.mxu0 0.0
  %218 = vmatprep.subr.mxu0 0.0
  %219 = vmatpush1.xpose.msra.mxu0 0.0
  %220 = vmatprep.subr.mxu0 0.0
  %221 = vmatpush1.xpose.msra.mxu0 0.0
  %222 = vmatprep.subr.mxu0 0.0
  %223 = vmatpush1.xpose.msra.mxu0 0.0
  %224 = vmatprep.subr.mxu0 0.0
  %225 = vmatpush1.xpose.msra.mxu0 0.0
  %226 = vmatprep.subr.mxu0 0.0
  %227 = vmatpush1.xpose.msra.mxu0 0.0
  %228 = vmatprep.subr.mxu0 0.0
  %229 = vmatpush1.xpose.msra.mxu0 0.0
  %230 = vmatprep.subr.mxu0 0.0
  %231 = vmatpush1.xpose.msra.mxu0 0.0
  %232 = vmatprep.subr.mxu0 0.0
  %233 = vmatpush1.xpose.msra.mxu0 0.0
  %234 = vmatprep.subr.mxu0 0.0
  %235 = vmatpush1.xpose.msra.mxu0 0.0
  %236 = vmatprep.subr.mxu0 0.0
  %237 = vmatpush1.xpose.msra.mxu0 0.0
  %238 = vmatprep.subr.mxu0 0.0
  %239 = vmatpush1.xpose.msra.mxu0 0.0
  %240 = vmatprep.subr.mxu0 0.0
  %241 = vmatpush1.xpose.msra.mxu0 0.0
  %242 = vmatprep.subr.mxu0 0.0
  %243 = vmatpush1.xpose.msra.mxu0 0.0
  %244 = vmatprep.subr.mxu0 0.0
  %245 = vmatpush1.xpose.msra.mxu0 0.0
  %246 = vmatprep.subr.mxu0 0.0
  %247 = vmatpush1.xpose.msra.mxu0 0.0
  %248 = vmatprep.subr.mxu0 0.0
  %249 = vmatpush1.xpose.msra.mxu0 0.0
  %250 = vmatprep.subr.mxu0 0.0
  %251 = vmatpush1.xpose.msra.mxu0 0.0
  %252 = vmatprep.subr.mxu0 0.0
  %253 = vmatpush1.xpose.msra.mxu0 0.0
  %254 = vmatprep.subr.mxu0 0.0
  %255 = vmatpush1.xpose.msra.mxu0 0.0
  %256 = vmatprep.subr.mxu0 0.0
  %257 = vmatpush1.xpose.msra.mxu0 0.0
  %258 = vmatprep.subr.mxu0 0.0
  %259 = vmatpush1.xpose.msra.mxu0 0.0
  %260 = vmatprep.subr.mxu0 0.0
  %261 = vmatpush1.xpose.msra.mxu0 0.0
  %262 = vmatprep.subr.mxu0 0.0
  %263 = vmatpush1.xpose.msra.mxu0 0.0
  %264 = vmatprep.subr.mxu0 0.0
  %265 = vmatpush1.xpose.msra.mxu0 0.0
  %266 = vmatprep.subr.mxu0 0.0
  %267 = vmatpush1.xpose.msra.mxu0 0.0
  %268 = vmatprep.subr.mxu0 0.0
  %269 = vmatpush1.xpose.msra.mxu0 0.0
  %270 = vmatprep.subr.mxu0 0.0
  %271 = vmatpush1.xpose.msra.mxu0 0.0
  %272 = vmatprep.subr.mxu0 0.0
  %273 = vmatpush1.xpose.msra.mxu0 0.0
  %274 = vmatprep.mubr.f32.mxu0 0.0
  %275 = vmatmul.mubr.f32.gmra.mrb[0].mxu0 %v206
  %v276 = vpop.f32.mrb[0].mxu0
  %v277 = vadd.f32 0.0, %v276
  %v278 = vpop.f32.mrb[0].mxu0
  %279 = vdwg.mxu0
  %vm280 = vcmask 27648
  %v281 = vsel %vm280, %v277, -inf
  %282 = vmax.xlane.f32.xlu0 %v281
  %v283 = vpop.xlane.xlu0 %282
  %v284 = vsub.f32 %v277, %v283
  %v285 = vmul.f32 %v284, 1.442695
  %v286 = vpow.pop %v285
  %v287 = vsel %vm280, %v286, 0.0
  %288 = vadd.xlane.f32.xlu0 %v287
  %v289 = vpop.xlane.xlu0 %288
  %v290 = vrcp.pop %v289
  %v291 = vmul.f32 %v286, %v290
  %v292 = vsel %vm280, %v291, 0.0
  %v293 = vrot.slane %v292, 4
  %v294 = vadd.f32 %v292, %v293
  %v295 = vrot.slane %v294, 2
  %v296 = vadd.f32 %v294, %v295
  %v297 = vrot.slane %v296, 1
  %v298 = vadd.f32 %v296, %v297
  %v299 = vrcp.pop 4.0
  %v300 = vmul.f32 %v298, %v299
  %vm301 = vcmask 64548
  %v302 = vsel %vm301, %v277, -inf
  %303 = vmax.xlane.f32.xlu0 %v302
  %v304 = vpop.xlane.xlu0 %303
  %v305 = vsub.f32 %v277, %v304
  %v306 = vmul.f32 %v305, 1.442695
  %v307 = vpow.pop %v306
  %309 = vrot.lane.b32.xlu0 %v307, 124
  %v310 = vpop.permute.xlu0 %309
  %vm312 = vcmask 31748
  %v313 = vsel %vm312, %v310, 0.0
  %314 = vadd.xlane.f32.xlu0 %v313
  %v315 = vpop.xlane.xlu0 %314
  %v316 = vrcp.pop %v315
  %v317 = vmul.f32 %v307, %v316
  %v319 = vrot.slane %v317, 4
  %vm321 = vcmask 60448
  %v322 = vsel %vm321, %v319, 0.0
  %v323 = vrot.slane %v322, 4
  %v324 = vadd.f32 %v322, %v323
  %v325 = vrot.slane %v324, 2
  %v326 = vadd.f32 %v324, %v325
  %v327 = vrot.slane %v326, 1
  %v328 = vadd.f32 %v326, %v327
  %v329 = vmul.f32 %v328, %v299
  %v330 = vadd.s32 %v75, 128
  %v331 = vadd.s32 %v75, 256
  %v332 = vadd.s32 %v75, 384
  %vm333 = vcmp.lt.s32.totalorder %v75, 256
  %vm334 = vcmp.lt.s32.totalorder %v330, 256
  %vm335 = vcmp.lt.s32.totalorder %v331, 256
  %vm336 = vcmp.lt.s32.totalorder %v332, 256
  %s337 = vtos %v300
  %339 = vrot.lane.b32.xlu0 %v329, 124
  %v340 = vpop.permute.xlu0 %339
  %s342 = vtos %v340
  %v343 = vstv %s337
  %v344 = vstv %s342
  %v345 = vsel %vm333, %v343, %v344
  %v346 = vsel %vm334, %v343, %v344
  %v347 = vsel %vm335, %v343, %v344
  %v348 = vsel %vm336, %v343, %v344
  %v349 = vmul.f32 %v21, %v345
  %v350 = vmul.f32 %v22, %v346
  %v351 = vmul.f32 %v23, %v347
  %v352 = vmul.f32 %v24, %v348
  %353 = vrot.lane.b32.xlu0 %v300, 127
  %v354 = vpop.permute.xlu0 %353
  %s355 = vtos %v354
  %356 = vrot.lane.b32.xlu0 %v340, 127
  %v357 = vpop.permute.xlu0 %356
  %s358 = vtos %v357
  %v359 = vstv %s355
  %v360 = vstv %s358
  %v361 = vsel %vm333, %v359, %v360
  %v362 = vsel %vm334, %v359, %v360
  %v363 = vsel %vm335, %v359, %v360
  %v364 = vsel %vm336, %v359, %v360
  %v365 = vmul.f32 %v25, %v361
  %v366 = vmul.f32 %v26, %v362
  %v367 = vmul.f32 %v27, %v363
  %v368 = vmul.f32 %v28, %v364
  %v369 = vadd.f32 %v349, %v365
  %v370 = vadd.f32 %v350, %v366
  %v371 = vadd.f32 %v351, %v367
  %v372 = vadd.f32 %v352, %v368
  %373 = vrot.lane.b32.xlu0 %v300, 126
  %v374 = vpop.permute.xlu0 %373
  %s375 = vtos %v374
  %376 = vrot.lane.b32.xlu0 %v340, 126
  %v377 = vpop.permute.xlu0 %376
  %s378 = vtos %v377
  %v379 = vstv %s375
  %v380 = vstv %s378
  %v381 = vsel %vm333, %v379, %v380
  %v382 = vsel %vm334, %v379, %v380
  %v383 = vsel %vm335, %v379, %v380
  %v384 = vsel %vm336, %v379, %v380
  %v385 = vmul.f32 %v29, %v381
  %v386 = vmul.f32 %v30, %v382
  %v387 = vmul.f32 %v31, %v383
  %v388 = vmul.f32 %v32, %v384
  %v389 = vadd.f32 %v369, %v385
  %v390 = vadd.f32 %v370, %v386
  %v391 = vadd.f32 %v371, %v387
  %v392 = vadd.f32 %v372, %v388
  %393 = vrot.lane.b32.xlu0 %v300, 125
  %v394 = vpop.permute.xlu0 %393
  %s395 = vtos %v394
  %396 = vrot.lane.b32.xlu0 %v340, 125
  %v397 = vpop.permute.xlu0 %396
  %s398 = vtos %v397
  %v399 = vstv %s395
  %v400 = vstv %s398
  %v401 = vsel %vm333, %v399, %v400
  %v402 = vsel %vm334, %v399, %v400
  %v403 = vsel %vm335, %v399, %v400
  %v404 = vsel %vm336, %v399, %v400
  %v405 = vmul.f32 %v33, %v401
  %v406 = vmul.f32 %v34, %v402
  %v407 = vmul.f32 %v35, %v403
  %v408 = vmul.f32 %v36, %v404
  %v409 = vadd.f32 %v389, %v405
  %v410 = vadd.f32 %v390, %v406
  %v411 = vadd.f32 %v391, %v407
  %v412 = vadd.f32 %v392, %v408
  %v413 = vadd.f32 %v21, %v25
  %v414 = vadd.f32 %v413, %v29
  %v415 = vadd.f32 %v414, %v33
  %v416 = vadd.f32 %v22, %v26
  %v417 = vadd.f32 %v416, %v30
  %v418 = vadd.f32 %v417, %v34
  %v419 = vadd.f32 %v23, %v27
  %v420 = vadd.f32 %v419, %v31
  %v421 = vadd.f32 %v420, %v35
  %v422 = vadd.f32 %v24, %v28
  %v423 = vadd.f32 %v422, %v32
  %v424 = vadd.f32 %v423, %v36
  %v425 = vmul.f32 %v415, %v299
  %v426 = vmul.f32 %v418, %v299
  %v427 = vmul.f32 %v421, %v299
  %v428 = vmul.f32 %v424, %v299
  %430 = vrot.lane.b32.xlu0 %v128, 112
  %v431 = vpop.permute.xlu0 %430
  %v432 = vsel %vm129, %v431, 0
  %434 = vmatprep.subr.mxu0 %v410
  %435 = vmatpush1.msra.mxu0 %v409
  %436 = vmatprep.subr.mxu0 0.0
  %437 = vmatpush1.msra.mxu0 0.0
  %438 = vmatprep.subr.mxu0 0.0
  %439 = vmatpush1.msra.mxu0 0.0
  %440 = vmatprep.subr.mxu0 0.0
  %441 = vmatpush1.msra.mxu0 0.0
  %442 = vmatprep.subr.mxu0 0.0
  %443 = vmatpush1.msra.mxu0 0.0
  %444 = vmatprep.subr.mxu0 0.0
  %445 = vmatpush1.msra.mxu0 0.0
  %446 = vmatprep.subr.mxu0 0.0
  %447 = vmatpush1.msra.mxu0 0.0
  %448 = vmatprep.subr.mxu0 0.0
  %449 = vmatpush1.msra.mxu0 0.0
  %450 = vmatprep.subr.mxu0 0.0
  %451 = vmatpush1.msra.mxu0 0.0
  %452 = vmatprep.subr.mxu0 0.0
  %453 = vmatpush1.msra.mxu0 0.0
  %454 = vmatprep.subr.mxu0 0.0
  %455 = vmatpush1.msra.mxu0 0.0
  %456 = vmatprep.subr.mxu0 0.0
  %457 = vmatpush1.msra.mxu0 0.0
  %458 = vmatprep.subr.mxu0 0.0
  %459 = vmatpush1.msra.mxu0 0.0
  %460 = vmatprep.subr.mxu0 0.0
  %461 = vmatpush1.msra.mxu0 0.0
  %462 = vmatprep.subr.mxu0 0.0
  %463 = vmatpush1.msra.mxu0 0.0
  %464 = vmatprep.subr.mxu0 0.0
  %465 = vmatpush1.msra.mxu0 0.0
  %466 = vmatprep.subr.mxu0 0.0
  %467 = vmatpush1.msra.mxu0 0.0
  %468 = vmatprep.subr.mxu0 0.0
  %469 = vmatpush1.msra.mxu0 0.0
  %470 = vmatprep.subr.mxu0 0.0
  %471 = vmatpush1.msra.mxu0 0.0
  %472 = vmatprep.subr.mxu0 0.0
  %473 = vmatpush1.msra.mxu0 0.0
  %474 = vmatprep.subr.mxu0 0.0
  %475 = vmatpush1.msra.mxu0 0.0
  %476 = vmatprep.subr.mxu0 0.0
  %477 = vmatpush1.msra.mxu0 0.0
  %478 = vmatprep.subr.mxu0 0.0
  %479 = vmatpush1.msra.mxu0 0.0
  %480 = vmatprep.subr.mxu0 0.0
  %481 = vmatpush1.msra.mxu0 0.0
  %482 = vmatprep.subr.mxu0 0.0
  %483 = vmatpush1.msra.mxu0 0.0
  %484 = vmatprep.subr.mxu0 0.0
  %485 = vmatpush1.msra.mxu0 0.0
  %486 = vmatprep.subr.mxu0 0.0
  %487 = vmatpush1.msra.mxu0 0.0
  %488 = vmatprep.subr.mxu0 0.0
  %489 = vmatpush1.msra.mxu0 0.0
  %490 = vmatprep.subr.mxu0 0.0
  %491 = vmatpush1.msra.mxu0 0.0
  %492 = vmatprep.subr.mxu0 0.0
  %493 = vmatpush1.msra.mxu0 0.0
  %494 = vmatprep.subr.mxu0 0.0
  %495 = vmatpush1.msra.mxu0 0.0
  %496 = vmatprep.subr.mxu0 0.0
  %497 = vmatpush1.msra.mxu0 0.0
  %498 = vmatprep.mubr.f32.mxu0 0.0
  %499 = vmatmul.mubr.f32.gmra.mrb[0].mxu0 %v432
  %v500 = vpop.f32.mrb[0].mxu0
  %v501 = vadd.f32 %v425, %v500
  %v502 = vpop.f32.mrb[0].mxu0
  %v503 = vadd.f32 %v426, %v502
  %504 = vdwg.mxu0
  %505 = vmatprep.subr.mxu0 %v412
  %506 = vmatpush1.msra.mxu0 %v411
  %507 = vmatprep.subr.mxu0 0.0
  %508 = vmatpush1.msra.mxu0 0.0
  %509 = vmatprep.subr.mxu0 0.0
  %510 = vmatpush1.msra.mxu0 0.0
  %511 = vmatprep.subr.mxu0 0.0
  %512 = vmatpush1.msra.mxu0 0.0
  %513 = vmatprep.subr.mxu0 0.0
  %514 = vmatpush1.msra.mxu0 0.0
  %515 = vmatprep.subr.mxu0 0.0
  %516 = vmatpush1.msra.mxu0 0.0
  %517 = vmatprep.subr.mxu0 0.0
  %518 = vmatpush1.msra.mxu0 0.0
  %519 = vmatprep.subr.mxu0 0.0
  %520 = vmatpush1.msra.mxu0 0.0
  %521 = vmatprep.subr.mxu0 0.0
  %522 = vmatpush1.msra.mxu0 0.0
  %523 = vmatprep.subr.mxu0 0.0
  %524 = vmatpush1.msra.mxu0 0.0
  %525 = vmatprep.subr.mxu0 0.0
  %526 = vmatpush1.msra.mxu0 0.0
  %527 = vmatprep.subr.mxu0 0.0
  %528 = vmatpush1.msra.mxu0 0.0
  %529 = vmatprep.subr.mxu0 0.0
  %530 = vmatpush1.msra.mxu0 0.0
  %531 = vmatprep.subr.mxu0 0.0
  %532 = vmatpush1.msra.mxu0 0.0
  %533 = vmatprep.subr.mxu0 0.0
  %534 = vmatpush1.msra.mxu0 0.0
  %535 = vmatprep.subr.mxu0 0.0
  %536 = vmatpush1.msra.mxu0 0.0
  %537 = vmatprep.subr.mxu0 0.0
  %538 = vmatpush1.msra.mxu0 0.0
  %539 = vmatprep.subr.mxu0 0.0
  %540 = vmatpush1.msra.mxu0 0.0
  %541 = vmatprep.subr.mxu0 0.0
  %542 = vmatpush1.msra.mxu0 0.0
  %543 = vmatprep.subr.mxu0 0.0
  %544 = vmatpush1.msra.mxu0 0.0
  %545 = vmatprep.subr.mxu0 0.0
  %546 = vmatpush1.msra.mxu0 0.0
  %547 = vmatprep.subr.mxu0 0.0
  %548 = vmatpush1.msra.mxu0 0.0
  %549 = vmatprep.subr.mxu0 0.0
  %550 = vmatpush1.msra.mxu0 0.0
  %551 = vmatprep.subr.mxu0 0.0
  %552 = vmatpush1.msra.mxu0 0.0
  %553 = vmatprep.subr.mxu0 0.0
  %554 = vmatpush1.msra.mxu0 0.0
  %555 = vmatprep.subr.mxu0 0.0
  %556 = vmatpush1.msra.mxu0 0.0
  %557 = vmatprep.subr.mxu0 0.0
  %558 = vmatpush1.msra.mxu0 0.0
  %559 = vmatprep.subr.mxu0 0.0
  %560 = vmatpush1.msra.mxu0 0.0
  %561 = vmatprep.subr.mxu0 0.0
  %562 = vmatpush1.msra.mxu0 0.0
  %563 = vmatprep.subr.mxu0 0.0
  %564 = vmatpush1.msra.mxu0 0.0
  %565 = vmatprep.subr.mxu0 0.0
  %566 = vmatpush1.msra.mxu0 0.0
  %567 = vmatprep.subr.mxu0 0.0
  %568 = vmatpush1.msra.mxu0 0.0
  %569 = vmatprep.mubr.f32.mxu0 0.0
  %570 = vmatmul.mubr.f32.gmra.mrb[0].mxu0 %v432
  %v571 = vpop.f32.mrb[0].mxu0
  %v572 = vadd.f32 %v427, %v571
  %v573 = vpop.f32.mrb[0].mxu0
  %v574 = vadd.f32 %v428, %v573
  %575 = vdwg.mxu0
  %v576 = vld [vmem:[%s4] sm:$0xff]
  %v578 = vcombine.high %v576, %v576
  %v580 = vld [vmem:[%s3] sm:$0xff]
  %v581 = vld [vmem:[%s3 + $0x8] sm:$0xff]
  %v582 = vld [vmem:[%s3 + $0x10] sm:$0x1]
  %v583 = vld [vmem:[%s3 + $0x18] sm:$0x1]
  %584 = vrot.lane.b32.xlu0 %v501, 17
  %v585 = vpop.permute.xlu0 %584
  %586 = vrot.lane.b32.xlu0 %v572, 17
  %v587 = vpop.permute.xlu0 %586
  %588 = vrot.lane.b32.xlu0 %v576, 17
  %v589 = vpop.permute.xlu0 %588
  %590 = vrot.lane.b32.xlu0 %v503, 17
  %v591 = vpop.permute.xlu0 %590
  %592 = vrot.lane.b32.xlu0 %v574, 17
  %v593 = vpop.permute.xlu0 %592
  %594 = vrot.lane.b32.xlu0 %v578, 17
  %v595 = vpop.permute.xlu0 %594
  %vm596 = vcmp.lt.s32.totalorder %v75, 17
  %v597 = vsel %vm596, %v585, %v591
  %v598 = vsel %vm596, %v587, %v593
  %v599 = vsel %vm596, %v589, %v595
  %v600 = vsel %vm596, %v591, %v585
  %v601 = vsel %vm596, %v593, %v587
  %v602 = vsel %vm596, %v595, %v589
  %v603 = vlaneseq
  %v604 = vshrl.u32 %v603, 7
  %v605 = vsub.s32 0, %v604
  %v606 = vrot.slane %v580, %v605
  %v607 = vlaneseq
  %v608 = vshrl.u32 %v607, 7
  %v609 = vsub.s32 0, %v608
  %v610 = vrot.slane %v581, %v609
  %v611 = vmul.f32 %v600, %v606
  %v612 = vmul.f32 %v597, %v610
  %v613 = vmul.f32 %v601, %v606
  %v614 = vmul.f32 %v598, %v610
  %v615 = vmul.f32 %v602, %v606
  %v616 = vmul.f32 %v599, %v610
  %617 = vrot.lane.b32.xlu0 %v501, 16
  %v618 = vpop.permute.xlu0 %617
  %619 = vrot.lane.b32.xlu0 %v572, 16
  %v620 = vpop.permute.xlu0 %619
  %621 = vrot.lane.b32.xlu0 %v576, 16
  %v622 = vpop.permute.xlu0 %621
  %623 = vrot.lane.b32.xlu0 %v503, 16
  %v624 = vpop.permute.xlu0 %623
  %625 = vrot.lane.b32.xlu0 %v574, 16
  %v626 = vpop.permute.xlu0 %625
  %627 = vrot.lane.b32.xlu0 %v578, 16
  %v628 = vpop.permute.xlu0 %627
  %vm629 = vcmp.lt.s32.totalorder %v75, 16
  %v630 = vsel %vm629, %v618, %v624
  %v631 = vsel %vm629, %v620, %v626
  %v632 = vsel %vm629, %v622, %v628
  %v633 = vsel %vm629, %v624, %v618
  %v634 = vsel %vm629, %v626, %v620
  %v635 = vsel %vm629, %v628, %v622
  %v636 = vlaneseq
  %v637 = vshrl.u32 %v636, 7
  %v638 = vsub.s32 1, %v637
  %v639 = vrot.slane %v580, %v638
  %v640 = vlaneseq
  %v641 = vshrl.u32 %v640, 7
  %v642 = vsub.s32 1, %v641
  %v643 = vrot.slane %v581, %v642
  %v644 = vmul.f32 %v633, %v639
  %v645 = vmul.f32 %v630, %v643
  %v646 = vmul.f32 %v634, %v639
  %v647 = vmul.f32 %v631, %v643
  %v648 = vmul.f32 %v635, %v639
  %v649 = vmul.f32 %v632, %v643
  %650 = vrot.lane.b32.xlu0 %v501, 15
  %v651 = vpop.permute.xlu0 %650
  %652 = vrot.lane.b32.xlu0 %v572, 15
  %v653 = vpop.permute.xlu0 %652
  %654 = vrot.lane.b32.xlu0 %v576, 15
  %v655 = vpop.permute.xlu0 %654
  %656 = vrot.lane.b32.xlu0 %v503, 15
  %v657 = vpop.permute.xlu0 %656
  %658 = vrot.lane.b32.xlu0 %v574, 15
  %v659 = vpop.permute.xlu0 %658
  %660 = vrot.lane.b32.xlu0 %v578, 15
  %v661 = vpop.permute.xlu0 %660
  %vm662 = vcmp.lt.s32.totalorder %v75, 15
  %v663 = vsel %vm662, %v651, %v657
  %v664 = vsel %vm662, %v653, %v659
  %v665 = vsel %vm662, %v655, %v661
  %v666 = vsel %vm662, %v657, %v651
  %v667 = vsel %vm662, %v659, %v653
  %v668 = vsel %vm662, %v661, %v655
  %v669 = vlaneseq
  %v670 = vshrl.u32 %v669, 7
  %v671 = vsub.s32 2, %v670
  %v672 = vrot.slane %v580, %v671
  %v673 = vlaneseq
  %v674 = vshrl.u32 %v673, 7
  %v675 = vsub.s32 2, %v674
  %v676 = vrot.slane %v581, %v675
  %v677 = vmul.f32 %v666, %v672
  %v678 = vmul.f32 %v663, %v676
  %v679 = vmul.f32 %v667, %v672
  %v680 = vmul.f32 %v664, %v676
  %v681 = vmul.f32 %v668, %v672
  %v682 = vmul.f32 %v665, %v676
  %683 = vrot.lane.b32.xlu0 %v501, 1
  %v684 = vpop.permute.xlu0 %683
  %685 = vrot.lane.b32.xlu0 %v572, 1
  %v686 = vpop.permute.xlu0 %685
  %687 = vrot.lane.b32.xlu0 %v576, 1
  %v688 = vpop.permute.xlu0 %687
  %689 = vrot.lane.b32.xlu0 %v503, 1
  %v690 = vpop.permute.xlu0 %689
  %691 = vrot.lane.b32.xlu0 %v574, 1
  %v692 = vpop.permute.xlu0 %691
  %693 = vrot.lane.b32.xlu0 %v578, 1
  %v694 = vpop.permute.xlu0 %693
  %vm695 = vcmp.lt.s32.totalorder %v75, 1
  %v696 = vsel %vm695, %v684, %v690
  %v697 = vsel %vm695, %v686, %v692
  %v698 = vsel %vm695, %v688, %v694
  %v699 = vsel %vm695, %v690, %v684
  %v700 = vsel %vm695, %v692, %v686
  %v701 = vsel %vm695, %v694, %v688
  %v702 = vlaneseq
  %v703 = vshrl.u32 %v702, 7
  %v704 = vsub.s32 3, %v703
  %v705 = vrot.slane %v580, %v704
  %v706 = vlaneseq
  %v707 = vshrl.u32 %v706, 7
  %v708 = vsub.s32 3, %v707
  %v709 = vrot.slane %v581, %v708
  %v710 = vmul.f32 %v699, %v705
  %v711 = vmul.f32 %v696, %v709
  %v712 = vmul.f32 %v700, %v705
  %v713 = vmul.f32 %v697, %v709
  %v714 = vmul.f32 %v701, %v705
  %v715 = vmul.f32 %v698, %v709
  %716 = vrot.lane.b32.xlu0 %v501, 127
  %v717 = vpop.permute.xlu0 %716
  %718 = vrot.lane.b32.xlu0 %v572, 127
  %v719 = vpop.permute.xlu0 %718
  %720 = vrot.lane.b32.xlu0 %v576, 127
  %v721 = vpop.permute.xlu0 %720
  %722 = vrot.lane.b32.xlu0 %v503, 127
  %v723 = vpop.permute.xlu0 %722
  %724 = vrot.lane.b32.xlu0 %v574, 127
  %v725 = vpop.permute.xlu0 %724
  %726 = vrot.lane.b32.xlu0 %v578, 127
  %v727 = vpop.permute.xlu0 %726
  %vm728 = vcmp.lt.s32.totalorder %v75, 127
  %v729 = vsel %vm728, %v717, %v723
  %v730 = vsel %vm728, %v719, %v725
  %v731 = vsel %vm728, %v721, %v727
  %v732 = vsel %vm728, %v723, %v717
  %v733 = vsel %vm728, %v725, %v719
  %v734 = vsel %vm728, %v727, %v721
  %v735 = vlaneseq
  %v736 = vshrl.u32 %v735, 7
  %v737 = vsub.s32 5, %v736
  %v738 = vrot.slane %v580, %v737
  %v739 = vlaneseq
  %v740 = vshrl.u32 %v739, 7
  %v741 = vsub.s32 5, %v740
  %v742 = vrot.slane %v581, %v741
  %v743 = vmul.f32 %v729, %v738
  %v744 = vmul.f32 %v732, %v742
  %v745 = vmul.f32 %v730, %v738
  %v746 = vmul.f32 %v733, %v742
  %v747 = vmul.f32 %v731, %v738
  %v748 = vmul.f32 %v734, %v742
  %749 = vrot.lane.b32.xlu0 %v501, 113
  %v750 = vpop.permute.xlu0 %749
  %751 = vrot.lane.b32.xlu0 %v572, 113
  %v752 = vpop.permute.xlu0 %751
  %753 = vrot.lane.b32.xlu0 %v576, 113
  %v754 = vpop.permute.xlu0 %753
  %755 = vrot.lane.b32.xlu0 %v503, 113
  %v756 = vpop.permute.xlu0 %755
  %757 = vrot.lane.b32.xlu0 %v574, 113
  %v758 = vpop.permute.xlu0 %757
  %759 = vrot.lane.b32.xlu0 %v578, 113
  %v760 = vpop.permute.xlu0 %759
  %vm761 = vcmp.lt.s32.totalorder %v75, 113
  %v762 = vsel %vm761, %v750, %v756
  %v763 = vsel %vm761, %v752, %v758
  %v764 = vsel %vm761, %v754, %v760
  %v765 = vsel %vm761, %v756, %v750
  %v766 = vsel %vm761, %v758, %v752
  %v767 = vsel %vm761, %v760, %v754
  %v768 = vlaneseq
  %v769 = vshrl.u32 %v768, 7
  %v770 = vsub.s32 6, %v769
  %v771 = vrot.slane %v580, %v770
  %v772 = vlaneseq
  %v773 = vshrl.u32 %v772, 7
  %v774 = vsub.s32 6, %v773
  %v775 = vrot.slane %v581, %v774
  %v776 = vmul.f32 %v762, %v771
  %v777 = vmul.f32 %v765, %v775
  %v778 = vmul.f32 %v763, %v771
  %v779 = vmul.f32 %v766, %v775
  %v780 = vmul.f32 %v764, %v771
  %v781 = vmul.f32 %v767, %v775
  %782 = vrot.lane.b32.xlu0 %v501, 112
  %v783 = vpop.permute.xlu0 %782
  %784 = vrot.lane.b32.xlu0 %v572, 112
  %v785 = vpop.permute.xlu0 %784
  %786 = vrot.lane.b32.xlu0 %v576, 112
  %v787 = vpop.permute.xlu0 %786
  %788 = vrot.lane.b32.xlu0 %v503, 112
  %v789 = vpop.permute.xlu0 %788
  %790 = vrot.lane.b32.xlu0 %v574, 112
  %v791 = vpop.permute.xlu0 %790
  %792 = vrot.lane.b32.xlu0 %v578, 112
  %v793 = vpop.permute.xlu0 %792
  %vm794 = vcmp.lt.s32.totalorder %v75, 112
  %v795 = vsel %vm794, %v783, %v789
  %v796 = vsel %vm794, %v785, %v791
  %v797 = vsel %vm794, %v787, %v793
  %v798 = vsel %vm794, %v789, %v783
  %v799 = vsel %vm794, %v791, %v785
  %v800 = vsel %vm794, %v793, %v787
  %v801 = vlaneseq
  %v802 = vshrl.u32 %v801, 7
  %v803 = vsub.s32 7, %v802
  %v804 = vrot.slane %v580, %v803
  %v805 = vlaneseq
  %v806 = vshrl.u32 %v805, 7
  %v807 = vsub.s32 7, %v806
  %v808 = vrot.slane %v581, %v807
  %v809 = vmul.f32 %v795, %v804
  %v810 = vmul.f32 %v798, %v808
  %v811 = vmul.f32 %v796, %v804
  %v812 = vmul.f32 %v799, %v808
  %v813 = vmul.f32 %v797, %v804
  %v814 = vmul.f32 %v800, %v808
  %815 = vrot.lane.b32.xlu0 %v501, 111
  %v816 = vpop.permute.xlu0 %815
  %817 = vrot.lane.b32.xlu0 %v572, 111
  %v818 = vpop.permute.xlu0 %817
  %819 = vrot.lane.b32.xlu0 %v576, 111
  %v820 = vpop.permute.xlu0 %819
  %821 = vrot.lane.b32.xlu0 %v503, 111
  %v822 = vpop.permute.xlu0 %821
  %823 = vrot.lane.b32.xlu0 %v574, 111
  %v824 = vpop.permute.xlu0 %823
  %825 = vrot.lane.b32.xlu0 %v578, 111
  %v826 = vpop.permute.xlu0 %825
  %vm827 = vcmp.lt.s32.totalorder %v75, 111
  %v828 = vsel %vm827, %v816, %v822
  %v829 = vsel %vm827, %v818, %v824
  %v830 = vsel %vm827, %v820, %v826
  %v831 = vsel %vm827, %v822, %v816
  %v832 = vsel %vm827, %v824, %v818
  %v833 = vsel %vm827, %v826, %v820
  %v834 = vlaneseq
  %v835 = vshrl.u32 %v834, 7
  %v836 = vsub.s32 0, %v835
  %v837 = vrot.slane %v582, %v836
  %v838 = vlaneseq
  %v839 = vshrl.u32 %v838, 7
  %v840 = vsub.s32 0, %v839
  %v841 = vrot.slane %v583, %v840
  %v842 = vmul.f32 %v828, %v837
  %v843 = vmul.f32 %v831, %v841
  %v844 = vmul.f32 %v829, %v837
  %v845 = vmul.f32 %v832, %v841
  %v846 = vmul.f32 %v830, %v837
  %v847 = vmul.f32 %v833, %v841
  %v854 = vrot.slane %v644, 4
  %v855 = vrot.slane %v645, 4
  %v856 = vrot.slane %v646, 4
  %v857 = vsel %vm126, %v854, %v856
  %v858 = vrot.slane %v647, 4
  %v859 = vsel %vm126, %v855, %v858
  %v860 = vrot.slane %v648, 4
  %v861 = vsel %vm126, %v856, %v860
  %v862 = vrot.slane %v649, 4
  %v863 = vsel %vm126, %v858, %v862
  %v876 = vrot.slane %v710, 4
  %v877 = vrot.slane %v711, 4
  %v878 = vrot.slane %v712, 4
  %v879 = vsel %vm126, %v876, %v878
  %v880 = vrot.slane %v713, 4
  %v881 = vsel %vm126, %v877, %v880
  %v882 = vrot.slane %v714, 4
  %v883 = vsel %vm126, %v878, %v882
  %v884 = vrot.slane %v715, 4
  %v885 = vsel %vm126, %v880, %v884
  %v898 = vrot.slane %v743, 4
  %v899 = vrot.slane %v744, 4
  %v900 = vrot.slane %v745, 4
  %v901 = vsel %vm126, %v898, %v900
  %v902 = vrot.slane %v746, 4
  %v903 = vsel %vm126, %v899, %v902
  %v904 = vrot.slane %v747, 4
  %v905 = vsel %vm126, %v900, %v904
  %v906 = vrot.slane %v748, 4
  %v907 = vsel %vm126, %v902, %v906
  %v920 = vrot.slane %v809, 4
  %v921 = vrot.slane %v810, 4
  %v922 = vrot.slane %v811, 4
  %v923 = vsel %vm126, %v920, %v922
  %v924 = vrot.slane %v812, 4
  %v925 = vsel %vm126, %v921, %v924
  %v926 = vrot.slane %v813, 4
  %v927 = vsel %vm126, %v922, %v926
  %v928 = vrot.slane %v814, 4
  %v929 = vsel %vm126, %v924, %v928
  %v936 = vsel %vm126, %v615, %v854
  %v937 = vsel %vm126, %v616, %v855
  %v938 = vsel %vm126, %v681, %v876
  %v939 = vsel %vm126, %v682, %v877
  %v940 = vsel %vm126, %v576, %v898
  %v941 = vsel %vm126, %v578, %v899
  %v942 = vsel %vm126, %v780, %v920
  %v943 = vsel %vm126, %v781, %v921
  %v944 = vsel %vm126, %v846, 1.0
  %v945 = vsel %vm126, %v847, 1.0
  %v946 = vld [vmem:[%s2] sm:$0xff]
  %v947 = vpack.c.bf16 %v613, %v611
  %v948 = vpack.c.bf16 %v614, %v612
  %v949 = vpack.c.bf16 %v857, %v936
  %v950 = vpack.c.bf16 %v859, %v937
  %v951 = vpack.c.bf16 %v677, %v861
  %v952 = vpack.c.bf16 %v678, %v863
  %v953 = vpack.c.bf16 %v938, %v679
  %v954 = vpack.c.bf16 %v939, %v680
  %v955 = vpack.c.bf16 %v883, %v879
  %v956 = vpack.c.bf16 %v885, %v881
  %v957 = vpack.c.bf16 %v572, %v501
  %v958 = vpack.c.bf16 %v574, %v503
  %v959 = vpack.c.bf16 %v901, %v940
  %v960 = vpack.c.bf16 %v903, %v941
  %v961 = vpack.c.bf16 %v776, %v905
  %v962 = vpack.c.bf16 %v777, %v907
  %v963 = vpack.c.bf16 %v942, %v778
  %v964 = vpack.c.bf16 %v943, %v779
  %v965 = vpack.c.bf16 %v927, %v923
  %v966 = vpack.c.bf16 %v929, %v925
  %v967 = vpack.c.bf16 %v844, %v842
  %v968 = vpack.c.bf16 %v845, %v843
  %v969 = vpack.c.bf16 %v944, %v944
  %v970 = vpack.c.bf16 %v945, %v945
  %v972 = vunpack.c.l.b16 %v946
  %v973 = vunpack.c.h.b16 %v946
  %v974 = vpack.c.b16 %v972, %v972
  %v975 = vpack.c.b16 %v973, %v973
  %vm977 = vcmask 433152
  %v979 = vsel %vm977, %v975, 0
  %vm981 = vcmask 1041408
  %vm982 = vcmask 1042432
  %v983 = vsel %vm981, 4294967295, 65535
  %v984 = vsel %vm982, %v983, 0
  %v986 = vand.u32 %v969, %v984
  %v989 = vand.u32 %v970, %v984
  %991 = vmatprep.subr.bf16.mxu0 %v948
  %992 = vmatpush1.bf16.msra.mxu0 %v947
  %993 = vmatprep.subr.bf16.mxu0 %v950
  %994 = vmatpush1.bf16.msra.mxu0 %v949
  %995 = vmatprep.subr.bf16.mxu0 %v952
  %996 = vmatpush1.bf16.msra.mxu0 %v951
  %997 = vmatprep.subr.bf16.mxu0 %v954
  %998 = vmatpush1.bf16.msra.mxu0 %v953
  %999 = vmatprep.subr.bf16.mxu0 %v956
  %1000 = vmatpush1.bf16.msra.mxu0 %v955
  %1001 = vmatprep.subr.bf16.mxu0 %v958
  %1002 = vmatpush1.bf16.msra.mxu0 %v957
  %1003 = vmatprep.subr.bf16.mxu0 %v960
  %1004 = vmatpush1.bf16.msra.mxu0 %v959
  %1005 = vmatprep.subr.bf16.mxu0 %v962
  %1006 = vmatpush1.bf16.msra.mxu0 %v961
  %1007 = vmatprep.subr.bf16.mxu0 %v964
  %1008 = vmatpush1.bf16.msra.mxu0 %v963
  %1009 = vmatprep.subr.bf16.mxu0 %v966
  %1010 = vmatpush1.bf16.msra.mxu0 %v965
  %1011 = vmatprep.subr.bf16.mxu0 %v968
  %1012 = vmatpush1.bf16.msra.mxu0 %v967
  %1013 = vmatprep.subr.bf16.mxu0 %v989
  %1014 = vmatpush1.bf16.msra.mxu0 %v986
  %1015 = vmatprep.subr.bf16.mxu0 0
  %1016 = vmatpush1.bf16.msra.mxu0 0
  %1017 = vmatprep.subr.bf16.mxu0 0
  %1018 = vmatpush1.bf16.msra.mxu0 0
  %1019 = vmatprep.subr.bf16.mxu0 0
  %1020 = vmatpush1.bf16.msra.mxu0 0
  %1021 = vmatprep.subr.bf16.mxu0 0
  %1022 = vmatpush1.bf16.msra.mxu0 0
  %1023 = vmatprep.mubr.bf16.mxu0 %v979
  %1024 = vmatmul.mubr.bf16.gmra.mrb[0].mxu0 %v974
  %v1025 = vpop.f32.mrb[0].mxu0
  %v1026 = vadd.f32 0.0, %v1025
  %v1027 = vpop.f32.mrb[0].mxu0
  %v1028 = vadd.f32 0.0, %v1027
  %v1029 = vpop.f32.mrb[0].mxu0
  %v1030 = vpop.f32.mrb[0].mxu0
  %1031 = vdwg.mxu0
  %1032 = vst [vmem:[%s5] sm:$0xff] %v1026
  %1033 = vst [vmem:[%s5 + $0x8] sm:$0xff] %v1028
  // Predicated region
  $region22: #{non_local_late_forward.1} parent=0 // pred_check
    _
  $region23: #{non_local_late_forward.1} parent=0 // pred_check_branch
    %1035 = sbr.rel (0) target = $region25
  $region24: #{non_local_late_forward.1} parent=0 // pred_region
    _
  $region25: #{non_local_late_forward.1} parent=0 // pred_fallthru
    _
  // Predicated region
  $region26: #{non_local_late_forward.1} parent=0 // pred_check
    _
  $region27: #{non_local_late_forward.1} parent=0 // pred_check_branch
    %1037 = sbr.rel (0) target = $region29
  $region28: #{non_local_late_forward.1} parent=0 // pred_region
    _
  $region29: #{non_local_late_forward.1} parent=0 // pred_fallthru
    _

</llo_original>
